<compile_context>
chip_gen: v5e
topology: v5e:2x2
jax: 0.10.0
libtpu: 0.0.40
codegen_flags: <defaults>
</compile_context>

<pallas_src>
import jax
import jax.numpy as jnp
from jax.experimental import pallas as pl
from jax.experimental.pallas import tpu as pltpu

EPS = 1e-5


def _round_up(x, m):
    return (x + m - 1) // m * m


def _bn_train(h, gamma=None, beta=None):
    # PyTorch BatchNorm1d, training mode: batch mean / biased batch var, eps=1e-5.
    # gamma is folded into the rsqrt scale so the per-element tail is one FMA.
    mean = jnp.mean(h, axis=0, keepdims=True)
    c = h - mean
    var = jnp.mean(c * c, axis=0, keepdims=True)
    scale = jax.lax.rsqrt(var + EPS)
    if gamma is not None:
        scale = scale * gamma           # cheap: one (1, H) row op
        return c * scale + beta
    return c * scale


def netwrapper_kernel(x_ref, wnet_ref,
                      w0_ref, g0_ref, b0_ref,
                      w1_ref, g1_ref, b1_ref,
                      w2_ref, o_ref, acc_ref):
    k = pl.program_id(0)

    @pl.when(k == 0)
    def _init():
        acc_ref[...] = jnp.zeros_like(acc_ref)

    # Weight-streaming backbone matmul: bf16 MXU inputs, f32 accumulation.
    acc_ref[...] += jnp.dot(x_ref[...], wnet_ref[...],
                            preferred_element_type=jnp.float32)

    @pl.when(k == pl.num_programs(0) - 1)
    def _finalize():
        rep = acc_ref[...].astype(jnp.bfloat16)                       # [B, E]

        # projector layer 0: Linear -> BN(affine) -> ReLU
        h = jnp.dot(rep, w0_ref[...], preferred_element_type=jnp.float32)
        h = _bn_train(h, g0_ref[...], b0_ref[...])
        h = jnp.maximum(h, 0.0).astype(jnp.bfloat16)

        # projector layer 1: Linear -> BN(affine) -> ReLU
        h = jnp.dot(h, w1_ref[...], preferred_element_type=jnp.float32)
        h = _bn_train(h, g1_ref[...], b1_ref[...])
        h = jnp.maximum(h, 0.0).astype(jnp.bfloat16)

        # projector layer 2: Linear -> BN(affine=False)
        h = jnp.dot(h, w2_ref[...], preferred_element_type=jnp.float32)
        o_ref[...] = _bn_train(h)                                     # lane-dense store


def _pad2(a, rows, cols, fill=0.0):
    return jnp.pad(a, ((0, rows - a.shape[0]), (0, cols - a.shape[1])),
                   constant_values=fill)


def _vmem_limit_bytes():
    try:
        kind = jax.devices()[0].device_kind.lower()
    except Exception:
        kind = ""
    if "v7" in kind:
        return 44 << 20     # v7x: 64 MiB physical VMEM per TC -> leave headroom
    return 100 << 20        # v5e / v6e: 128 MiB physical VMEM


def netwrapper_forward(x_nchw, params):
    wnet, w0, g0, b0, w1, g1, b1, w2 = params
    B = x_nchw.shape[0]
    Din, E = wnet.shape
    H = w0.shape[1]
    O = w2.shape[1]

    # lane-dense padded dims
    tk = min(512, _round_up(Din, 128))       # backbone K tile (multiple of 128)
    Din_p = _round_up(Din, tk)
    E_p = _round_up(E, 128)
    H_p = _round_up(H, 128)
    O_p = _round_up(O, 128)

    x_flat = x_nchw.reshape(B, -1).astype(jnp.float32)
    x_p = _pad2(x_flat, B, Din_p).astype(jnp.bfloat16)
    wnet_p = _pad2(wnet.astype(jnp.float32), Din_p, E_p).astype(jnp.bfloat16)
    w0_p = _pad2(w0.astype(jnp.float32), E_p, H_p).astype(jnp.bfloat16)
    w1_p = _pad2(w1.astype(jnp.float32), H_p, H_p).astype(jnp.bfloat16)
    w2_p = _pad2(w2.astype(jnp.float32), H_p, O_p).astype(jnp.bfloat16)
    g0_p = _pad2(g0.astype(jnp.float32), 1, H_p, fill=1.0)
    b0_p = _pad2(b0.astype(jnp.float32), 1, H_p)
    g1_p = _pad2(g1.astype(jnp.float32), 1, H_p, fill=1.0)
    b1_p = _pad2(b1.astype(jnp.float32), 1, H_p)

    n_k = Din_p // tk

    const = lambda shape: pl.BlockSpec(shape, lambda k: tuple(0 for _ in shape))

    out_p = pl.pallas_call(
        netwrapper_kernel,
        out_shape=jax.ShapeDtypeStruct((B, O_p), jnp.float32),
        grid_spec=pltpu.PrefetchScalarGridSpec(
            num_scalar_prefetch=0,
            grid=(n_k,),
            in_specs=[
                pl.BlockSpec((B, tk), lambda k: (0, k)),       # x: stream K
                pl.BlockSpec((tk, E_p), lambda k: (k, 0)),     # wnet: stream K
                const((E_p, H_p)), const((1, H_p)), const((1, H_p)),
                const((H_p, H_p)), const((1, H_p)), const((1, H_p)),
                const((H_p, O_p)),
            ],
            out_specs=pl.BlockSpec((B, O_p), lambda k: (0, 0)),
            scratch_shapes=[pltpu.VMEM((B, E_p), jnp.float32)],
        ),
        compiler_params=pltpu.CompilerParams(
            dimension_semantics=("arbitrary",),                # K reduction axis
            vmem_limit_bytes=_vmem_limit_bytes(),
        ),
    )(x_p, wnet_p, w0_p, g0_p, b0_p, w1_p, g1_p, b1_p, w2_p)

    # TODO(synk): on v7x, a second (parallel / core-parallel) grid axis over the
    # projector feature dim could split the finalize phase across the 2 TCs.
    return out_p[:, :O]


def netwrapper_ref(x_nchw, params):
    # Pure-JAX reference mirroring the kernel's bf16-matmul / f32-accumulate math.
    wnet, w0, g0, b0, w1, g1, b1, w2 = params
    bf, f32 = jnp.bfloat16, jnp.float32
    x = x_nchw.reshape(x_nchw.shape[0], -1)
    rep = jnp.dot(x.astype(bf), wnet.astype(bf), preferred_element_type=f32)
    h = jnp.dot(rep.astype(bf), w0.astype(bf), preferred_element_type=f32)
    h = jnp.maximum(_bn_train(h, g0, b0), 0.0)
    h = jnp.dot(h.astype(bf), w1.astype(bf), preferred_element_type=f32)
    h = jnp.maximum(_bn_train(h, g1, b1), 0.0)
    h = jnp.dot(h.astype(bf), w2.astype(bf), preferred_element_type=f32)
    return _bn_train(h)


if __name__ == "__main__":
    # small shapes: batch=8, channels=4, spatial=16x16
    B, C, H, W = 8, 4, 16, 16
    embed_size, mlp_hidden, out_dim = 32, 64, 32
    Din = C * H * W

    key = jax.random.PRNGKey(0)
    kx, kn, k0, k1, k2, kg0, kb0, kg1, kb1 = jax.random.split(key, 9)

    x = jax.random.normal(kx, (B, C, H, W), dtype=jnp.float32)

    # deterministic synthetic parameters (stored as [in, out] for x @ W)
    wnet = jax.random.normal(kn, (Din, embed_size), jnp.float32) * 0.02
    w0 = jax.random.normal(k0, (embed_size, mlp_hidden), jnp.float32) * 0.1
    g0 = 1.0 + 0.1 * jax.random.normal(kg0, (1, mlp_hidden), jnp.float32)
    b0 = 0.1 * jax.random.normal(kb0, (1, mlp_hidden), jnp.float32)
    w1 = jax.random.normal(k1, (mlp_hidden, mlp_hidden), jnp.float32) * 0.1
    g1 = 1.0 + 0.1 * jax.random.normal(kg1, (1, mlp_hidden), jnp.float32)
    b1 = 0.1 * jax.random.normal(kb1, (1, mlp_hidden), jnp.float32)
    w2 = jax.random.normal(k2, (mlp_hidden, out_dim), jnp.float32) * 0.1

    params = (wnet, w0, g0, b0, w1, g1, b1, w2)

    out = netwrapper_forward(x, params)
    out = jax.block_until_ready(out)

    ref = netwrapper_ref(x, params)
    assert out.shape == (B, out_dim)
    assert jnp.allclose(out, ref, atol=1e-2, rtol=1e-2), "mismatch vs reference"

    # TODO(synk): intermediate=True path (12 per-layer projectors over ViT
    # intermediate layers) and the optional predictor MLP are not exercised
    # here; only the default (intermediate=False, prediction=False) forward.
    print("KERNEL_OK")
</pallas_src>

<mosaic_0001>
module attributes {stable_mosaic.version = 11 : i64} {
  func.func @netwrapper_kernel(%arg0: i32, %arg1: memref<8x512xbf16, #tpu.memory_space<vmem>>, %arg2: memref<512x128xbf16, #tpu.memory_space<vmem>>, %arg3: memref<128x128xbf16, #tpu.memory_space<vmem>>, %arg4: memref<1x128xf32, #tpu.memory_space<vmem>>, %arg5: memref<1x128xf32, #tpu.memory_space<vmem>>, %arg6: memref<128x128xbf16, #tpu.memory_space<vmem>>, %arg7: memref<1x128xf32, #tpu.memory_space<vmem>>, %arg8: memref<1x128xf32, #tpu.memory_space<vmem>>, %arg9: memref<128x128xbf16, #tpu.memory_space<vmem>>, %arg10: memref<8x128xf32, #tpu.memory_space<vmem>>, %arg11: memref<8x128xf32, #tpu.memory_space<vmem>>) attributes {dimension_semantics = [#tpu.dimension_semantics<arbitrary>], iteration_bounds = array<i64: 2>, scalar_prefetch = 0 : i64, scratch_operands = 1 : i64, tpu.core_type = #tpu.core_type<tc>, window_params = [{transform_indices = @transform_0, window_bounds = array<i64: 8, 512>}, {transform_indices = @transform_1, window_bounds = array<i64: 512, 128>}, {pipeline_mode = #tpu.pipeline_mode<synchronous>, transform_indices = @transform_2, window_bounds = array<i64: 128, 128>}, {pipeline_mode = #tpu.pipeline_mode<synchronous>, transform_indices = @transform_3, window_bounds = array<i64: 1, 128>}, {pipeline_mode = #tpu.pipeline_mode<synchronous>, transform_indices = @transform_4, window_bounds = array<i64: 1, 128>}, {pipeline_mode = #tpu.pipeline_mode<synchronous>, transform_indices = @transform_5, window_bounds = array<i64: 128, 128>}, {pipeline_mode = #tpu.pipeline_mode<synchronous>, transform_indices = @transform_6, window_bounds = array<i64: 1, 128>}, {pipeline_mode = #tpu.pipeline_mode<synchronous>, transform_indices = @transform_7, window_bounds = array<i64: 1, 128>}, {pipeline_mode = #tpu.pipeline_mode<synchronous>, transform_indices = @transform_8, window_bounds = array<i64: 128, 128>}, {pipeline_mode = #tpu.pipeline_mode<synchronous>, transform_indices = @transform_9, window_bounds = array<i64: 8, 128>}]} {
    %c0_i32 = arith.constant 0 : i32
    %0 = arith.cmpi eq, %arg0, %c0_i32 : i32
    %1 = arith.extui %0 : i1 to i32
    %c0_i32_0 = arith.constant 0 : i32
    %2 = arith.cmpi ne, %1, %c0_i32_0 : i32
    scf.if %2 {
      %cst_9 = arith.constant 0.000000e+00 : f32
      %12 = vector.broadcast %cst_9 : f32 to vector<8x128xf32>
      %c0_10 = arith.constant 0 : index
      %c0_11 = arith.constant 0 : index
      %13 = vector.load %arg11[%c0_10, %c0_11] : memref<8x128xf32, #tpu.memory_space<vmem>>, vector<8x128xf32>
      tpu.vector_store %arg11[%c0_10, %c0_11], %12 {strides = array<i32>} : memref<8x128xf32, #tpu.memory_space<vmem>>, vector<8x128xf32>,
    } else {
    }
    %c0 = arith.constant 0 : index
    %c0_1 = arith.constant 0 : index
    %3 = vector.load %arg11[%c0, %c0_1] : memref<8x128xf32, #tpu.memory_space<vmem>>, vector<8x128xf32>
    %c0_2 = arith.constant 0 : index
    %c0_3 = arith.constant 0 : index
    %4 = vector.load %arg1[%c0_2, %c0_3] : memref<8x512xbf16, #tpu.memory_space<vmem>>, vector<8x512xbf16>
    %c0_4 = arith.constant 0 : index
    %c0_5 = arith.constant 0 : index
    %5 = vector.load %arg2[%c0_4, %c0_5] : memref<512x128xbf16, #tpu.memory_space<vmem>>, vector<512x128xbf16>
    %cst = arith.constant dense<0.000000e+00> : vector<8x128xf32>
    %6 = tpu.matmul %4, %5, %cst {dimension_numbers = #tpu.dot_dimension_numbers<[1], [0], [0], [1], [0, 0, 1, 1], [], []>} : vector<8x512xbf16>, vector<512x128xbf16>, vector<8x128xf32> -> vector<8x128xf32>
    %7 = arith.addf %3, %6 : vector<8x128xf32>
    %c0_6 = arith.constant 0 : index
    %c0_7 = arith.constant 0 : index
    %8 = vector.load %arg11[%c0_6, %c0_7] : memref<8x128xf32, #tpu.memory_space<vmem>>, vector<8x128xf32>
    tpu.vector_store %arg11[%c0_6, %c0_7], %7 {strides = array<i32>} : memref<8x128xf32, #tpu.memory_space<vmem>>, vector<8x128xf32>,
    %c1_i32 = arith.constant 1 : i32
    %9 = arith.cmpi eq, %arg0, %c1_i32 : i32
    %10 = arith.extui %9 : i1 to i32
    %c0_i32_8 = arith.constant 0 : i32
    %11 = arith.cmpi ne, %10, %c0_i32_8 : i32
    scf.if %11 {
      %c0_9 = arith.constant 0 : index
      %c0_10 = arith.constant 0 : index
      %12 = vector.load %arg11[%c0_9, %c0_10] : memref<8x128xf32, #tpu.memory_space<vmem>>, vector<8x128xf32>
      %13 = arith.truncf %12 : vector<8x128xf32> to vector<8x128xbf16>
      %c0_11 = arith.constant 0 : index
      %c0_12 = arith.constant 0 : index
      %14 = vector.load %arg3[%c0_11, %c0_12] : memref<128x128xbf16, #tpu.memory_space<vmem>>, vector<128x128xbf16>
      %cst_13 = arith.constant dense<0.000000e+00> : vector<8x128xf32>
      %15 = tpu.matmul %13, %14, %cst_13 {dimension_numbers = #tpu.dot_dimension_numbers<[1], [0], [0], [1], [0, 0, 1, 1], [], []>} : vector<8x128xbf16>, vector<128x128xbf16>, vector<8x128xf32> -> vector<8x128xf32>
      %c0_14 = arith.constant 0 : index
      %c0_15 = arith.constant 0 : index
      %16 = vector.load %arg4[%c0_14, %c0_15] : memref<1x128xf32, #tpu.memory_space<vmem>>, vector<1x128xf32>
      %c0_16 = arith.constant 0 : index
      %c0_17 = arith.constant 0 : index
      %17 = vector.load %arg5[%c0_16, %c0_17] : memref<1x128xf32, #tpu.memory_space<vmem>>, vector<1x128xf32>
      %cst_18 = arith.constant dense<0.000000e+00> : vector<128xf32>
      %18 = vector.multi_reduction <add>, %15, %cst_18 [0] : vector<8x128xf32> to vector<128xf32>
      %19 = vector.shape_cast %18 : vector<128xf32> to vector<1x128xf32>
      %cst_19 = arith.constant 8.000000e+00 : f32
      %20 = vector.broadcast %cst_19 : f32 to vector<1x128xf32>
      %21 = arith.divf %19, %20 : vector<1x128xf32>
      %22 = vector.broadcast %21 : vector<1x128xf32> to vector<8x128xf32>
      %23 = arith.subf %15, %22 : vector<8x128xf32>
      %24 = arith.mulf %23, %23 : vector<8x128xf32>
      %cst_20 = arith.constant dense<0.000000e+00> : vector<128xf32>
      %25 = vector.multi_reduction <add>, %24, %cst_20 [0] : vector<8x128xf32> to vector<128xf32>
      %26 = vector.shape_cast %25 : vector<128xf32> to vector<1x128xf32>
      %cst_21 = arith.constant 8.000000e+00 : f32
      %27 = vector.broadcast %cst_21 : f32 to vector<1x128xf32>
      %28 = arith.divf %26, %27 : vector<1x128xf32>
      %cst_22 = arith.constant 9.99999974E-6 : f32
      %29 = vector.broadcast %cst_22 : f32 to vector<1x128xf32>
      %30 = arith.addf %28, %29 : vector<1x128xf32>
      %31 = math.rsqrt %30 : vector<1x128xf32>
      %32 = arith.mulf %31, %16 : vector<1x128xf32>
      %33 = vector.broadcast %32 : vector<1x128xf32> to vector<8x128xf32>
      %34 = arith.mulf %23, %33 : vector<8x128xf32>
      %35 = vector.broadcast %17 : vector<1x128xf32> to vector<8x128xf32>
      %36 = arith.addf %34, %35 : vector<8x128xf32>
      %cst_23 = arith.constant 0.000000e+00 : f32
      %37 = vector.broadcast %cst_23 : f32 to vector<8x128xf32>
      %38 = arith.maximumf %36, %37 : vector<8x128xf32>
      %39 = arith.truncf %38 : vector<8x128xf32> to vector<8x128xbf16>
      %c0_24 = arith.constant 0 : index
      %c0_25 = arith.constant 0 : index
      %40 = vector.load %arg6[%c0_24, %c0_25] : memref<128x128xbf16, #tpu.memory_space<vmem>>, vector<128x128xbf16>
      %cst_26 = arith.constant dense<0.000000e+00> : vector<8x128xf32>
      %41 = tpu.matmul %39, %40, %cst_26 {dimension_numbers = #tpu.dot_dimension_numbers<[1], [0], [0], [1], [0, 0, 1, 1], [], []>} : vector<8x128xbf16>, vector<128x128xbf16>, vector<8x128xf32> -> vector<8x128xf32>
      %c0_27 = arith.constant 0 : index
      %c0_28 = arith.constant 0 : index
      %42 = vector.load %arg7[%c0_27, %c0_28] : memref<1x128xf32, #tpu.memory_space<vmem>>, vector<1x128xf32>
      %c0_29 = arith.constant 0 : index
      %c0_30 = arith.constant 0 : index
      %43 = vector.load %arg8[%c0_29, %c0_30] : memref<1x128xf32, #tpu.memory_space<vmem>>, vector<1x128xf32>
      %cst_31 = arith.constant dense<0.000000e+00> : vector<128xf32>
      %44 = vector.multi_reduction <add>, %41, %cst_31 [0] : vector<8x128xf32> to vector<128xf32>
      %45 = vector.shape_cast %44 : vector<128xf32> to vector<1x128xf32>
      %cst_32 = arith.constant 8.000000e+00 : f32
      %46 = vector.broadcast %cst_32 : f32 to vector<1x128xf32>
      %47 = arith.divf %45, %46 : vector<1x128xf32>
      %48 = vector.broadcast %47 : vector<1x128xf32> to vector<8x128xf32>
      %49 = arith.subf %41, %48 : vector<8x128xf32>
      %50 = arith.mulf %49, %49 : vector<8x128xf32>
      %cst_33 = arith.constant dense<0.000000e+00> : vector<128xf32>
      %51 = vector.multi_reduction <add>, %50, %cst_33 [0] : vector<8x128xf32> to vector<128xf32>
      %52 = vector.shape_cast %51 : vector<128xf32> to vector<1x128xf32>
      %cst_34 = arith.constant 8.000000e+00 : f32
      %53 = vector.broadcast %cst_34 : f32 to vector<1x128xf32>
      %54 = arith.divf %52, %53 : vector<1x128xf32>
      %cst_35 = arith.constant 9.99999974E-6 : f32
      %55 = vector.broadcast %cst_35 : f32 to vector<1x128xf32>
      %56 = arith.addf %54, %55 : vector<1x128xf32>
      %57 = math.rsqrt %56 : vector<1x128xf32>
      %58 = arith.mulf %57, %42 : vector<1x128xf32>
      %59 = vector.broadcast %58 : vector<1x128xf32> to vector<8x128xf32>
      %60 = arith.mulf %49, %59 : vector<8x128xf32>
      %61 = vector.broadcast %43 : vector<1x128xf32> to vector<8x128xf32>
      %62 = arith.addf %60, %61 : vector<8x128xf32>
      %cst_36 = arith.constant 0.000000e+00 : f32
      %63 = vector.broadcast %cst_36 : f32 to vector<8x128xf32>
      %64 = arith.maximumf %62, %63 : vector<8x128xf32>
      %65 = arith.truncf %64 : vector<8x128xf32> to vector<8x128xbf16>
      %c0_37 = arith.constant 0 : index
      %c0_38 = arith.constant 0 : index
      %66 = vector.load %arg9[%c0_37, %c0_38] : memref<128x128xbf16, #tpu.memory_space<vmem>>, vector<128x128xbf16>
      %cst_39 = arith.constant dense<0.000000e+00> : vector<8x128xf32>
      %67 = tpu.matmul %65, %66, %cst_39 {dimension_numbers = #tpu.dot_dimension_numbers<[1], [0], [0], [1], [0, 0, 1, 1], [], []>} : vector<8x128xbf16>, vector<128x128xbf16>, vector<8x128xf32> -> vector<8x128xf32>
      %cst_40 = arith.constant dense<0.000000e+00> : vector<128xf32>
      %68 = vector.multi_reduction <add>, %67, %cst_40 [0] : vector<8x128xf32> to vector<128xf32>
      %69 = vector.shape_cast %68 : vector<128xf32> to vector<1x128xf32>
      %cst_41 = arith.constant 8.000000e+00 : f32
      %70 = vector.broadcast %cst_41 : f32 to vector<1x128xf32>
      %71 = arith.divf %69, %70 : vector<1x128xf32>
      %72 = vector.broadcast %71 : vector<1x128xf32> to vector<8x128xf32>
      %73 = arith.subf %67, %72 : vector<8x128xf32>
      %74 = arith.mulf %73, %73 : vector<8x128xf32>
      %cst_42 = arith.constant dense<0.000000e+00> : vector<128xf32>
      %75 = vector.multi_reduction <add>, %74, %cst_42 [0] : vector<8x128xf32> to vector<128xf32>
      %76 = vector.shape_cast %75 : vector<128xf32> to vector<1x128xf32>
      %cst_43 = arith.constant 8.000000e+00 : f32
      %77 = vector.broadcast %cst_43 : f32 to vector<1x128xf32>
      %78 = arith.divf %76, %77 : vector<1x128xf32>
      %cst_44 = arith.constant 9.99999974E-6 : f32
      %79 = vector.broadcast %cst_44 : f32 to vector<1x128xf32>
      %80 = arith.addf %78, %79 : vector<1x128xf32>
      %81 = math.rsqrt %80 : vector<1x128xf32>
      %82 = vector.broadcast %81 : vector<1x128xf32> to vector<8x128xf32>
      %83 = arith.mulf %73, %82 : vector<8x128xf32>
      %c0_45 = arith.constant 0 : index
      %c0_46 = arith.constant 0 : index
      %84 = vector.load %arg10[%c0_45, %c0_46] : memref<8x128xf32, #tpu.memory_space<vmem>>, vector<8x128xf32>
      tpu.vector_store %arg10[%c0_45, %c0_46], %83 {strides = array<i32>} : memref<8x128xf32, #tpu.memory_space<vmem>>, vector<8x128xf32>,
    } else {
    }
    return
  }
  func.func @transform_0(%arg0: i32) -> (i32, i32) {
    %c0_i32 = arith.constant 0 : i32
    %c0_i32_0 = arith.constant 0 : i32
    return %c0_i32, %arg0 : i32, i32
  }
  func.func @transform_1(%arg0: i32) -> (i32, i32) {
    %c0_i32 = arith.constant 0 : i32
    %c0_i32_0 = arith.constant 0 : i32
    return %arg0, %c0_i32 : i32, i32
  }
  func.func @transform_2(%arg0: i32) -> (i32, i32) {
    %c0_i32 = arith.constant 0 : i32
    %c0_i32_0 = arith.constant 0 : i32
    %c0_i32_1 = arith.constant 0 : i32
    return %c0_i32, %c0_i32_0 : i32, i32
  }
  func.func @transform_3(%arg0: i32) -> (i32, i32) {
    %c0_i32 = arith.constant 0 : i32
    %c0_i32_0 = arith.constant 0 : i32
    %c0_i32_1 = arith.constant 0 : i32
    return %c0_i32, %c0_i32_0 : i32, i32
  }
  func.func @transform_4(%arg0: i32) -> (i32, i32) {
    %c0_i32 = arith.constant 0 : i32
    %c0_i32_0 = arith.constant 0 : i32
    %c0_i32_1 = arith.constant 0 : i32
    return %c0_i32, %c0_i32_0 : i32, i32
  }
  func.func @transform_5(%arg0: i32) -> (i32, i32) {
    %c0_i32 = arith.constant 0 : i32
    %c0_i32_0 = arith.constant 0 : i32
    %c0_i32_1 = arith.constant 0 : i32
    return %c0_i32, %c0_i32_0 : i32, i32
  }
  func.func @transform_6(%arg0: i32) -> (i32, i32) {
    %c0_i32 = arith.constant 0 : i32
    %c0_i32_0 = arith.constant 0 : i32
    %c0_i32_1 = arith.constant 0 : i32
    return %c0_i32, %c0_i32_0 : i32, i32
  }
  func.func @transform_7(%arg0: i32) -> (i32, i32) {
    %c0_i32 = arith.constant 0 : i32
    %c0_i32_0 = arith.constant 0 : i32
    %c0_i32_1 = arith.constant 0 : i32
    return %c0_i32, %c0_i32_0 : i32, i32
  }
  func.func @transform_8(%arg0: i32) -> (i32, i32) {
    %c0_i32 = arith.constant 0 : i32
    %c0_i32_0 = arith.constant 0 : i32
    %c0_i32_1 = arith.constant 0 : i32
    return %c0_i32, %c0_i32_0 : i32, i32
  }
  func.func @transform_9(%arg0: i32) -> (i32, i32) {
    %c0_i32 = arith.constant 0 : i32
    %c0_i32_0 = arith.constant 0 : i32
    %c0_i32_1 = arith.constant 0 : i32
    return %c0_i32, %c0_i32_0 : i32, i32
  }
}

</mosaic_0001>

<llo_original>
// kernel: tpu_custom_call.1
$region0: #{tpu_custom_call.1}
  #allocation0 [shape = 'u32[]', space=smem, size = 0x4, offset = 0x4, fixed_abs, tag = 'smem constant byte address 0x4 - core index']
  #allocation1 [shape = 'u32[72,128]{1,0:T(1,128)}', space=vmem, size = 0x9000, scoped, tag = 'internal scratch']
  #allocation2 [shape = 'f32[8,128]{1,0:T(8,128)}', space=vmem, size = 0x1000, scoped, tag = 'scratch operand']
  %s0 = inlined_call_operand.hbm [shape: bf16[8,1024], index: 0, kind: input, shape index: {}]
  %s1 = inlined_call_operand.hbm [shape: bf16[1024,128], index: 1, kind: input, shape index: {}]
  %s2 = inlined_call_operand.hbm [shape: bf16[128,128], index: 2, kind: input, shape index: {}]
  %s3 = inlined_call_operand.vmem [shape: f32[1,128], index: 3, kind: input, shape index: {}]
  %s4 = inlined_call_operand.vmem [shape: f32[1,128], index: 4, kind: input, shape index: {}]
  %s5 = inlined_call_operand.hbm [shape: bf16[128,128], index: 5, kind: input, shape index: {}]
  %s6 = inlined_call_operand.vmem [shape: f32[1,128], index: 6, kind: input, shape index: {}]
  %s7 = inlined_call_operand.vmem [shape: f32[1,128], index: 7, kind: input, shape index: {}]
  %s8 = inlined_call_operand.hbm [shape: bf16[128,128], index: 8, kind: input, shape index: {}]
  %s9 = inlined_call_operand.hbm [shape: f32[8,128], index: 9, kind: output, shape index: {}]
  %s10 = sld [smem:[#allocation0]]
  $region97: #{tpu_custom_call.1} parent=0
    _
  %s12 = ssub.s32 1, %s10
  %s13 = scalar_select 0, %s12, %s10
  $region1: #{tpu_custom_call.1} parent=0
    #allocation3 [shape = 'u8[16384]{0}', space=vmem, size = 0x4000, scoped, tag = 'input window, operand 0']
    #allocation4 [shape = 's32[2]{0}', space=sflag, size = 0x8, scoped, tag = 'scoped memory for tpu_custom_call.1']
    #allocation5 [shape = 's32[2]{0}', space=sflag, size = 0x8, scoped, tag = 'scoped memory for tpu_custom_call.1']
    #allocation6 [shape = 'u8[262144]{0}', space=vmem, size = 0x40000, scoped, tag = 'input window, operand 1']
    #allocation7 [shape = 's32[2]{0}', space=sflag, size = 0x8, scoped, tag = 'scoped memory for tpu_custom_call.1']
    #allocation8 [shape = 'u8[32768]{0}', space=vmem, size = 0x8000, scoped, tag = 'input window, operand 2, single buffered']
    #allocation9 [shape = 'u8[32768]{0}', space=vmem, size = 0x8000, scoped, tag = 'input window, operand 5, single buffered']
    #allocation10 [shape = 's32[1]{0}', space=sflag, size = 0x4, scoped, tag = 'scoped memory for tpu_custom_call.1']
    #allocation11 [shape = 'u8[32768]{0}', space=vmem, size = 0x8000, scoped, tag = 'input window, operand 8, single buffered']
    #allocation12 [shape = 'u8[4096]{0}', space=vmem, size = 0x1000, scoped, tag = 'output window, operand 0, single buffered']
    %14 = vsyncpa [#allocation4], 0
    %s15 = scalar_lea.sflag [#allocation4], 1
    %16 = vsyncpa %s15, 0
    %17 = vsyncpa [#allocation7], 0
    %s18 = scalar_lea.sflag [#allocation7], 1
    %19 = vsyncpa %s18, 0
    %20 = vsyncpa [#allocation10], 0
    %21 = vsyncpa [#allocation5], 0
    loop: start=0, step=1, limit=4
    $region2: #{tpu_custom_call.1} parent=1 // loop_pre_header
      _
    $region3: #{tpu_custom_call.1} parent=1 // loop_header
      %s23 = sphi 0, %s27
      %p24 = scmp.ge.s32.totalorder %s23, 4
      %s33 = sphi 0, %s35
      %s36 = sphi 0, %s33
      %s37 = sphi 0, %s36
      %s53 = sphi 0, %s37
      %s59 = sphi 0, %s61
      %s62 = sphi 0, %s59
      %s63 = sphi 0, %s62
      %s79 = sphi 0, %s63
      %s83 = sphi 0, %s83
      %s85 = sphi 0, %s83
      %s86 = sphi 0, %s85
      %s100 = sphi 0, %s86
      %s104 = sphi 0, %s104
      %s106 = sphi 0, %s104
      %s107 = sphi 0, %s106
      %s121 = sphi 0, %s107
      %s125 = sphi 0, %s125
      %s127 = sphi 0, %s125
      %s128 = sphi 0, %s127
      %s142 = sphi 0, %s128
      %s146 = sphi 0, %s146
      %s148 = sphi 0, %s146
      %s149 = sphi 0, %s148
      %s163 = sphi 0, %s149
      %s167 = sphi 0, %s167
      %s169 = sphi 0, %s167
      %s170 = sphi 0, %s169
      %s184 = sphi 0, %s170
      %s188 = sphi 0, %s188
      %s190 = sphi 0, %s188
      %s191 = sphi 0, %s190
      %s205 = sphi 0, %s191
      %s209 = sphi 0, %s209
      %s211 = sphi 0, %s209
      %s212 = sphi 0, %s211
      %s226 = sphi 0, %s212
      %s230 = sphi 0, %s230
      %s232 = sphi 0, %s230
      %s233 = sphi 0, %s232
      %s247 = sphi 0, %s233
    $region4: #{tpu_custom_call.1} parent=1 // loop_header_branch
      %26 = sbr.rel (%p24) target = $region8
    $region5: #{tpu_custom_call.1} parent=1 // loop_body
      %s28 = ssub.s32 %s23, 1
      %s29 = ssub.s32 %s23, 2
      %s30 = sadd.s32 %s23, 1
      %s31 = ssub.s32 %s23, %s30
      %p32 = scmp.eq.s32.totalorder %s31, 0
      %s34 = sadd.s32 %s33, 1
      %s35 = scalar_select %p32, %s33, %s34
      %p38 = pneg %p32
      %p39 = scmp.eq.s32.totalorder %s23, 1
      %p40 = por %p38, %p39
      %p41 = scmp.ne.s32.totalorder %s33, %s36
      %p42 = scmp.eq.s32.totalorder %s23, 0
      %p43 = por %p41, %p42
      %p44 = scmp.ne.s32.totalorder %s33, %s36
      %p45 = scmp.eq.s32.totalorder %s28, 1
      %p46 = por %p44, %p45
      %p47 = scmp.ne.s32.totalorder %s36, %s37
      %p48 = scmp.eq.s32.totalorder %s28, 0
      %p49 = por %p47, %p48
      %p50 = scmp.ne.s32.totalorder %s36, %s37
      %p51 = scmp.eq.s32.totalorder %s29, 1
      %p52 = por %p50, %p51
      %p54 = scmp.ne.s32.totalorder %s37, %s53
      %p55 = scmp.eq.s32.totalorder %s29, 0
      %p56 = por %p54, %p55
      %s57 = ssub.s32 %s23, %s30
      %p58 = scmp.eq.s32.totalorder %s57, 0
      %s60 = sadd.s32 %s59, 1
      %s61 = scalar_select %p58, %s59, %s60
      %p64 = pneg %p58
      %p65 = scmp.eq.s32.totalorder %s23, 1
      %p66 = por %p64, %p65
      %p67 = scmp.ne.s32.totalorder %s59, %s62
      %p68 = scmp.eq.s32.totalorder %s23, 0
      %p69 = por %p67, %p68
      %p70 = scmp.ne.s32.totalorder %s59, %s62
      %p71 = scmp.eq.s32.totalorder %s28, 1
      %p72 = por %p70, %p71
      %p73 = scmp.ne.s32.totalorder %s62, %s63
      %p74 = scmp.eq.s32.totalorder %s28, 0
      %p75 = por %p73, %p74
      %p76 = scmp.ne.s32.totalorder %s62, %s63
      %p77 = scmp.eq.s32.totalorder %s29, 1
      %p78 = por %p76, %p77
      %p80 = scmp.ne.s32.totalorder %s63, %s79
      %p81 = scmp.eq.s32.totalorder %s29, 0
      %p82 = por %p80, %p81
      %s84 = sadd.s32 %s83, 1
      %p87 = scmp.eq.s32.totalorder %s23, 1
      %p88 = scmp.ne.s32.totalorder %s83, %s85
      %p89 = scmp.eq.s32.totalorder %s23, 0
      %p90 = por %p88, %p89
      %p91 = scmp.ne.s32.totalorder %s83, %s85
      %p92 = scmp.eq.s32.totalorder %s28, 1
      %p93 = por %p91, %p92
      %p94 = scmp.ne.s32.totalorder %s85, %s86
      %p95 = scmp.eq.s32.totalorder %s28, 0
      %p96 = por %p94, %p95
      %p97 = scmp.ne.s32.totalorder %s85, %s86
      %p98 = scmp.eq.s32.totalorder %s29, 1
      %p99 = por %p97, %p98
      %p101 = scmp.ne.s32.totalorder %s86, %s100
      %p102 = scmp.eq.s32.totalorder %s29, 0
      %p103 = por %p101, %p102
      %s105 = sadd.s32 %s104, 1
      %p108 = scmp.eq.s32.totalorder %s23, 1
      %p109 = scmp.ne.s32.totalorder %s104, %s106
      %p110 = scmp.eq.s32.totalorder %s23, 0
      %p111 = por %p109, %p110
      %p112 = scmp.ne.s32.totalorder %s104, %s106
      %p113 = scmp.eq.s32.totalorder %s28, 1
      %p114 = por %p112, %p113
      %p115 = scmp.ne.s32.totalorder %s106, %s107
      %p116 = scmp.eq.s32.totalorder %s28, 0
      %p117 = por %p115, %p116
      %p118 = scmp.ne.s32.totalorder %s106, %s107
      %p119 = scmp.eq.s32.totalorder %s29, 1
      %p120 = por %p118, %p119
      %p122 = scmp.ne.s32.totalorder %s107, %s121
      %p123 = scmp.eq.s32.totalorder %s29, 0
      %p124 = por %p122, %p123
      %s126 = sadd.s32 %s125, 1
      %p129 = scmp.eq.s32.totalorder %s23, 1
      %p130 = scmp.ne.s32.totalorder %s125, %s127
      %p131 = scmp.eq.s32.totalorder %s23, 0
      %p132 = por %p130, %p131
      %p133 = scmp.ne.s32.totalorder %s125, %s127
      %p134 = scmp.eq.s32.totalorder %s28, 1
      %p135 = por %p133, %p134
      %p136 = scmp.ne.s32.totalorder %s127, %s128
      %p137 = scmp.eq.s32.totalorder %s28, 0
      %p138 = por %p136, %p137
      %p139 = scmp.ne.s32.totalorder %s127, %s128
      %p140 = scmp.eq.s32.totalorder %s29, 1
      %p141 = por %p139, %p140
      %p143 = scmp.ne.s32.totalorder %s128, %s142
      %p144 = scmp.eq.s32.totalorder %s29, 0
      %p145 = por %p143, %p144
      %s147 = sadd.s32 %s146, 1
      %p150 = scmp.eq.s32.totalorder %s23, 1
      %p151 = scmp.ne.s32.totalorder %s146, %s148
      %p152 = scmp.eq.s32.totalorder %s23, 0
      %p153 = por %p151, %p152
      %p154 = scmp.ne.s32.totalorder %s146, %s148
      %p155 = scmp.eq.s32.totalorder %s28, 1
      %p156 = por %p154, %p155
      %p157 = scmp.ne.s32.totalorder %s148, %s149
      %p158 = scmp.eq.s32.totalorder %s28, 0
      %p159 = por %p157, %p158
      %p160 = scmp.ne.s32.totalorder %s148, %s149
      %p161 = scmp.eq.s32.totalorder %s29, 1
      %p162 = por %p160, %p161
      %p164 = scmp.ne.s32.totalorder %s149, %s163
      %p165 = scmp.eq.s32.totalorder %s29, 0
      %p166 = por %p164, %p165
      %s168 = sadd.s32 %s167, 1
      %p171 = scmp.eq.s32.totalorder %s23, 1
      %p172 = scmp.ne.s32.totalorder %s167, %s169
      %p173 = scmp.eq.s32.totalorder %s23, 0
      %p174 = por %p172, %p173
      %p175 = scmp.ne.s32.totalorder %s167, %s169
      %p176 = scmp.eq.s32.totalorder %s28, 1
      %p177 = por %p175, %p176
      %p178 = scmp.ne.s32.totalorder %s169, %s170
      %p179 = scmp.eq.s32.totalorder %s28, 0
      %p180 = por %p178, %p179
      %p181 = scmp.ne.s32.totalorder %s169, %s170
      %p182 = scmp.eq.s32.totalorder %s29, 1
      %p183 = por %p181, %p182
      %p185 = scmp.ne.s32.totalorder %s170, %s184
      %p186 = scmp.eq.s32.totalorder %s29, 0
      %p187 = por %p185, %p186
      %s189 = sadd.s32 %s188, 1
      %p192 = scmp.eq.s32.totalorder %s23, 1
      %p193 = scmp.ne.s32.totalorder %s188, %s190
      %p194 = scmp.eq.s32.totalorder %s23, 0
      %p195 = por %p193, %p194
      %p196 = scmp.ne.s32.totalorder %s188, %s190
      %p197 = scmp.eq.s32.totalorder %s28, 1
      %p198 = por %p196, %p197
      %p199 = scmp.ne.s32.totalorder %s190, %s191
      %p200 = scmp.eq.s32.totalorder %s28, 0
      %p201 = por %p199, %p200
      %p202 = scmp.ne.s32.totalorder %s190, %s191
      %p203 = scmp.eq.s32.totalorder %s29, 1
      %p204 = por %p202, %p203
      %p206 = scmp.ne.s32.totalorder %s191, %s205
      %p207 = scmp.eq.s32.totalorder %s29, 0
      %p208 = por %p206, %p207
      %s210 = sadd.s32 %s209, 1
      %p213 = scmp.eq.s32.totalorder %s23, 1
      %p214 = scmp.ne.s32.totalorder %s209, %s211
      %p215 = scmp.eq.s32.totalorder %s23, 0
      %p216 = por %p214, %p215
      %p217 = scmp.ne.s32.totalorder %s209, %s211
      %p218 = scmp.eq.s32.totalorder %s28, 1
      %p219 = por %p217, %p218
      %p220 = scmp.ne.s32.totalorder %s211, %s212
      %p221 = scmp.eq.s32.totalorder %s28, 0
      %p222 = por %p220, %p221
      %p223 = scmp.ne.s32.totalorder %s211, %s212
      %p224 = scmp.eq.s32.totalorder %s29, 1
      %p225 = por %p223, %p224
      %p227 = scmp.ne.s32.totalorder %s212, %s226
      %p228 = scmp.eq.s32.totalorder %s29, 0
      %p229 = por %p227, %p228
      %s231 = sadd.s32 %s230, 1
      %p234 = scmp.eq.s32.totalorder %s23, 1
      %p235 = scmp.ne.s32.totalorder %s230, %s232
      %p236 = scmp.eq.s32.totalorder %s23, 0
      %p237 = por %p235, %p236
      %p238 = scmp.ne.s32.totalorder %s230, %s232
      %p239 = scmp.eq.s32.totalorder %s28, 1
      %p240 = por %p238, %p239
      %p241 = scmp.ne.s32.totalorder %s232, %s233
      %p242 = scmp.eq.s32.totalorder %s28, 0
      %p243 = por %p241, %p242
      %p244 = scmp.ne.s32.totalorder %s232, %s233
      %p245 = scmp.eq.s32.totalorder %s29, 1
      %p246 = por %p244, %p245
      %p248 = scmp.ne.s32.totalorder %s233, %s247
      %p249 = scmp.eq.s32.totalorder %s29, 0
      %p250 = por %p248, %p249
      %p251 = scmp.le.s32.totalorder 1, %s23
      %p252 = scmp.lt.s32.totalorder %s23, 3
      %p253 = pnand %p251, %p252
      %p254 = pneg %p253
      // Predicated region
      $region9: #{tpu_custom_call.1} parent=5 // pred_check
        _
      $region10: #{tpu_custom_call.1} parent=5 // pred_check_branch
        %256 = sbr.rel (%p253) target = $region12
      $region11: #{tpu_custom_call.1} parent=5 // pred_region
        %s257 = ssub.s32 %s23, 1
        // Predicated region
        $region13: #{tpu_custom_call.1} parent=11 // pred_check
          %p258 = pneg %p96
        $region14: #{tpu_custom_call.1} parent=11 // pred_check_branch
          %260 = sbr.rel (%p258) target = $region16
        $region15: #{tpu_custom_call.1} parent=11 // pred_region
          %262 = vsyncadd [#allocation7], 0
          %s263 = sshll.u32 %s2, 4
          %s264 = int_to_ptr.hbm [resolvable:$true] %s263
          %s265 = sshll.u32 [#allocation8], 4
          %s266 = int_to_ptr.vmem [resolvable:$true] %s265
          %271 = dma.hbm_to_vmem [thread:$0]  %s264, 1024, %s266, [#allocation7], 64, 64, 4
        $region16: #{tpu_custom_call.1} parent=11 // pred_fallthru
          _
        // Predicated region
        $region17: #{tpu_custom_call.1} parent=11 // pred_check
          %p272 = pneg %p117
        $region18: #{tpu_custom_call.1} parent=11 // pred_check_branch
          %274 = sbr.rel (%p272) target = $region20
        $region19: #{tpu_custom_call.1} parent=11 // pred_region
          _
        $region20: #{tpu_custom_call.1} parent=11 // pred_fallthru
          _
        // Predicated region
        $region21: #{tpu_custom_call.1} parent=11 // pred_check
          %p275 = pneg %p138
        $region22: #{tpu_custom_call.1} parent=11 // pred_check_branch
          %277 = sbr.rel (%p275) target = $region24
        $region23: #{tpu_custom_call.1} parent=11 // pred_region
          _
        $region24: #{tpu_custom_call.1} parent=11 // pred_fallthru
          _
        // Predicated region
        $region25: #{tpu_custom_call.1} parent=11 // pred_check
          %p278 = pneg %p159
        $region26: #{tpu_custom_call.1} parent=11 // pred_check_branch
          %280 = sbr.rel (%p278) target = $region28
        $region27: #{tpu_custom_call.1} parent=11 // pred_region
          %282 = vsyncadd [#allocation10], 0
          %s283 = sshll.u32 %s5, 4
          %s284 = int_to_ptr.hbm [resolvable:$true] %s283
          %s285 = sshll.u32 [#allocation9], 4
          %s286 = int_to_ptr.vmem [resolvable:$true] %s285
          %291 = dma.hbm_to_vmem [thread:$0]  %s284, 1024, %s286, [#allocation10], 64, 64, 4
        $region28: #{tpu_custom_call.1} parent=11 // pred_fallthru
          _
        // Predicated region
        $region29: #{tpu_custom_call.1} parent=11 // pred_check
          %p292 = pneg %p180
        $region30: #{tpu_custom_call.1} parent=11 // pred_check_branch
          %294 = sbr.rel (%p292) target = $region32
        $region31: #{tpu_custom_call.1} parent=11 // pred_region
          _
        $region32: #{tpu_custom_call.1} parent=11 // pred_fallthru
          _
        // Predicated region
        $region33: #{tpu_custom_call.1} parent=11 // pred_check
          %p295 = pneg %p201
        $region34: #{tpu_custom_call.1} parent=11 // pred_check_branch
          %297 = sbr.rel (%p295) target = $region36
        $region35: #{tpu_custom_call.1} parent=11 // pred_region
          _
        $region36: #{tpu_custom_call.1} parent=11 // pred_fallthru
          _
        // Predicated region
        $region37: #{tpu_custom_call.1} parent=11 // pred_check
          %p298 = pneg %p222
        $region38: #{tpu_custom_call.1} parent=11 // pred_check_branch
          %300 = sbr.rel (%p298) target = $region40
        $region39: #{tpu_custom_call.1} parent=11 // pred_region
          %302 = vsyncadd [#allocation10], 0
          %s303 = sshll.u32 %s8, 4
          %s304 = int_to_ptr.hbm [resolvable:$true] %s303
          %s305 = sshll.u32 [#allocation11], 4
          %s306 = int_to_ptr.vmem [resolvable:$true] %s305
          %311 = dma.hbm_to_vmem [thread:$0]  %s304, 1024, %s306, [#allocation10], 64, 64, 4
        $region40: #{tpu_custom_call.1} parent=11 // pred_fallthru
          _
      $region12: #{tpu_custom_call.1} parent=5 // pred_fallthru
        _
      %p312 = scmp.lt.s32.totalorder %s23, 2
      // Predicated region
      $region41: #{tpu_custom_call.1} parent=5 // pred_check
        %p313 = pneg %p312
      $region42: #{tpu_custom_call.1} parent=5 // pred_check_branch
        %315 = sbr.rel (%p313) target = $region44
      $region43: #{tpu_custom_call.1} parent=5 // pred_region
        // Predicated region
        $region45: #{tpu_custom_call.1} parent=43 // pred_check
          %p316 = pneg %p43
        $region46: #{tpu_custom_call.1} parent=43 // pred_check_branch
          %318 = sbr.rel (%p316) target = $region48
        $region47: #{tpu_custom_call.1} parent=43 // pred_region
          %s319 = sand.u32 %s33, 1
          %s320 = scalar_lea.sflag [#allocation4], %s319
          %s321 = sand.u32 %s33, 1
          %s322 = smul.addr %s321, 16
          %s323 = scalar_lea.vmem [#allocation3], %s322
          %s324 = smul.u32 4, %s23
          %326 = vsyncadd %s320, 0
          %s327 = smul.addr %s324, 4
          %s328 = scalar_lea.hbm %s0, %s327
          %s330 = sshll.u32 %s328, 4
          %s331 = int_to_ptr.hbm [resolvable:$true] %s330
          %s332 = sshll.u32 %s323, 4
          %s333 = int_to_ptr.vmem [resolvable:$true] %s332
          %335 = dma.hbm_to_vmem [thread:$0]  %s331, 256, %s333, %s320
        $region48: #{tpu_custom_call.1} parent=43 // pred_fallthru
          _
        // Predicated region
        $region49: #{tpu_custom_call.1} parent=43 // pred_check
          %p336 = pneg %p69
        $region50: #{tpu_custom_call.1} parent=43 // pred_check_branch
          %338 = sbr.rel (%p336) target = $region52
        $region51: #{tpu_custom_call.1} parent=43 // pred_region
          %s339 = sand.u32 %s23, 1
          %s340 = scalar_lea.sflag [#allocation7], %s339
          %s341 = sand.u32 %s59, 1
          %s342 = smul.addr %s341, 256
          %s343 = scalar_lea.vmem [#allocation6], %s342
          %s344 = smul.u32 64, %s23
          %346 = vsyncadd %s340, 0
          %s347 = smul.addr %s344, 4
          %s348 = scalar_lea.hbm %s1, %s347
          %s349 = sshll.u32 %s348, 4
          %s350 = int_to_ptr.hbm [resolvable:$true] %s349
          %s351 = sshll.u32 %s343, 4
          %s352 = int_to_ptr.vmem [resolvable:$true] %s351
          %357 = dma.hbm_to_vmem [thread:$0]  %s350, 4096, %s352, %s340, 64, 64, 4
        $region52: #{tpu_custom_call.1} parent=43 // pred_fallthru
          _
      $region44: #{tpu_custom_call.1} parent=5 // pred_fallthru
        _
      %p358 = scmp.le.s32.totalorder 1, %s23
      %p359 = scmp.lt.s32.totalorder %s23, 3
      %p360 = pnand %p358, %p359
      %p361 = pneg %p360
      // Predicated region
      $region53: #{tpu_custom_call.1} parent=5 // pred_check
        _
      $region54: #{tpu_custom_call.1} parent=5 // pred_check_branch
        %363 = sbr.rel (%p360) target = $region56
      $region55: #{tpu_custom_call.1} parent=5 // pred_region
        %s364 = ssub.s32 %s23, 1
        %s365 = sand.u32 %s36, 1
        %s366 = scalar_lea.sflag [#allocation4], %s365
        %s367 = sand.u32 %s36, 1
        %s368 = smul.addr %s367, 16
        %s369 = scalar_lea.vmem [#allocation3], %s368
        // Predicated region
        $region57: #{tpu_custom_call.1} parent=55 // pred_check
          %p370 = pneg %p49
        $region58: #{tpu_custom_call.1} parent=55 // pred_check_branch
          %372 = sbr.rel (%p370) target = $region60
        $region59: #{tpu_custom_call.1} parent=55 // pred_region
          %374 = dma.done %s366, 256
        $region60: #{tpu_custom_call.1} parent=55 // pred_fallthru
          _
        %s375 = sand.u32 %s28, 1
        %s376 = scalar_lea.sflag [#allocation7], %s375
        %s377 = sand.u32 %s62, 1
        %s378 = smul.addr %s377, 256
        %s379 = scalar_lea.vmem [#allocation6], %s378
        // Predicated region
        $region61: #{tpu_custom_call.1} parent=55 // pred_check
          %p380 = pneg %p75
        $region62: #{tpu_custom_call.1} parent=55 // pred_check_branch
          %382 = sbr.rel (%p380) target = $region64
        $region63: #{tpu_custom_call.1} parent=55 // pred_region
          %384 = dma.done %s376, 4096
        $region64: #{tpu_custom_call.1} parent=55 // pred_fallthru
          _
        // Predicated region
        $region65: #{tpu_custom_call.1} parent=55 // pred_check
          %p385 = pneg %p96
        $region66: #{tpu_custom_call.1} parent=55 // pred_check_branch
          %387 = sbr.rel (%p385) target = $region68
        $region67: #{tpu_custom_call.1} parent=55 // pred_region
          %389 = dma.done [#allocation7], 1024
        $region68: #{tpu_custom_call.1} parent=55 // pred_fallthru
          _
        // Predicated region
        $region69: #{tpu_custom_call.1} parent=55 // pred_check
          %p390 = pneg %p159
        $region70: #{tpu_custom_call.1} parent=55 // pred_check_branch
          %392 = sbr.rel (%p390) target = $region72
        $region71: #{tpu_custom_call.1} parent=55 // pred_region
          %394 = dma.done [#allocation10], 1024
        $region72: #{tpu_custom_call.1} parent=55 // pred_fallthru
          _
        // Predicated region
        $region73: #{tpu_custom_call.1} parent=55 // pred_check
          %p395 = pneg %p222
        $region74: #{tpu_custom_call.1} parent=55 // pred_check_branch
          %397 = sbr.rel (%p395) target = $region76
        $region75: #{tpu_custom_call.1} parent=55 // pred_region
          %399 = dma.done [#allocation10], 1024
        $region76: #{tpu_custom_call.1} parent=55 // pred_fallthru
          _
        %s400 = sand.u32 %s36, 1
        %s401 = scalar_lea.sflag [#allocation4], %s400
        %s402 = sand.u32 %s36, 1
        %s403 = smul.addr %s402, 16
        %s404 = scalar_lea.vmem [#allocation3], %s403
        %p405 = pneg %p49
        %p406 = pneg %p46
        %s407 = sand.u32 %s28, 1
        %s408 = scalar_lea.sflag [#allocation7], %s407
        %s409 = sand.u32 %s62, 1
        %s410 = smul.addr %s409, 256
        %s411 = scalar_lea.vmem [#allocation6], %s410
        %p412 = pneg %p75
        %p413 = pneg %p72
        %p414 = pneg %p96
        %p415 = pneg %p93
        %p416 = pneg %p117
        %p417 = pneg %p114
        %p418 = pneg %p138
        %p419 = pneg %p135
        %p420 = pneg %p159
        %p421 = pneg %p156
        %p422 = pneg %p180
        %p423 = pneg %p177
        %p424 = pneg %p201
        %p425 = pneg %p198
        %p426 = pneg %p222
        %p427 = pneg %p219
        %p428 = pneg %p243
        %p429 = pneg %p240
        %s430 = smul.u32 4, %s28
        %s431 = smul.u32 64, %s28
        %p432 = scmp.eq.s32.totalorder %s28, 0
        // Predicated region
        $region77: #{tpu_custom_call.1} parent=55 // pred_check
          %p433 = pneg %p432
        $region78: #{tpu_custom_call.1} parent=55 // pred_check_branch
          %435 = sbr.rel (%p433) target = $region80
        $region79: #{tpu_custom_call.1} parent=55 // pred_region
          %436 = vst [vmem:[#allocation2] sm:$0xff] 0.0
        $region80: #{tpu_custom_call.1} parent=55 // pred_fallthru
          _
        %v437 = vld [vmem:[#allocation2] sm:$0xff]
        %v438 = vld [vmem:[%s369] sm:$0xff]
        %v439 = vld [vmem:[%s369 + $0x8] sm:$0xff]
        %v440 = vld [vmem:[%s379] sm:$0xf]
        %v441 = vld [vmem:[%s379 + $0x4] sm:$0xf]
        %v442 = vld [vmem:[%s379 + $0x8] sm:$0xf]
        %v443 = vld [vmem:[%s379 + $0xc] sm:$0xf]
        %v444 = vld [vmem:[%s379 + $0x10] sm:$0xf]
        %v445 = vld [vmem:[%s379 + $0x14] sm:$0xf]
        %v446 = vld [vmem:[%s379 + $0x18] sm:$0xf]
        %v447 = vld [vmem:[%s379 + $0x1c] sm:$0xf]
        %v448 = vld [vmem:[%s379 + $0x20] sm:$0xf]
        %v449 = vld [vmem:[%s379 + $0x24] sm:$0xf]
        %v450 = vld [vmem:[%s379 + $0x28] sm:$0xf]
        %v451 = vld [vmem:[%s379 + $0x2c] sm:$0xf]
        %v452 = vld [vmem:[%s379 + $0x30] sm:$0xf]
        %v453 = vld [vmem:[%s379 + $0x34] sm:$0xf]
        %v454 = vld [vmem:[%s379 + $0x38] sm:$0xf]
        %v455 = vld [vmem:[%s379 + $0x3c] sm:$0xf]
        %v456 = vld [vmem:[%s379 + $0x40] sm:$0xf]
        %v457 = vld [vmem:[%s379 + $0x44] sm:$0xf]
        %v458 = vld [vmem:[%s379 + $0x48] sm:$0xf]
        %v459 = vld [vmem:[%s379 + $0x4c] sm:$0xf]
        %v460 = vld [vmem:[%s379 + $0x50] sm:$0xf]
        %v461 = vld [vmem:[%s379 + $0x54] sm:$0xf]
        %v462 = vld [vmem:[%s379 + $0x58] sm:$0xf]
        %v463 = vld [vmem:[%s379 + $0x5c] sm:$0xf]
        %v464 = vld [vmem:[%s379 + $0x60] sm:$0xf]
        %v465 = vld [vmem:[%s379 + $0x64] sm:$0xf]
        %v466 = vld [vmem:[%s379 + $0x68] sm:$0xf]
        %v467 = vld [vmem:[%s379 + $0x6c] sm:$0xf]
        %v468 = vld [vmem:[%s379 + $0x70] sm:$0xf]
        %v469 = vld [vmem:[%s379 + $0x74] sm:$0xf]
        %v470 = vld [vmem:[%s379 + $0x78] sm:$0xf]
        %v471 = vld [vmem:[%s379 + $0x7c] sm:$0xf]
        %v472 = vld [vmem:[%s379 + $0x80] sm:$0xf]
        %v473 = vld [vmem:[%s379 + $0x84] sm:$0xf]
        %v474 = vld [vmem:[%s379 + $0x88] sm:$0xf]
        %v475 = vld [vmem:[%s379 + $0x8c] sm:$0xf]
        %v476 = vld [vmem:[%s379 + $0x90] sm:$0xf]
        %v477 = vld [vmem:[%s379 + $0x94] sm:$0xf]
        %v478 = vld [vmem:[%s379 + $0x98] sm:$0xf]
        %v479 = vld [vmem:[%s379 + $0x9c] sm:$0xf]
        %v480 = vld [vmem:[%s379 + $0xa0] sm:$0xf]
        %v481 = vld [vmem:[%s379 + $0xa4] sm:$0xf]
        %v482 = vld [vmem:[%s379 + $0xa8] sm:$0xf]
        %v483 = vld [vmem:[%s379 + $0xac] sm:$0xf]
        %v484 = vld [vmem:[%s379 + $0xb0] sm:$0xf]
        %v485 = vld [vmem:[%s379 + $0xb4] sm:$0xf]
        %v486 = vld [vmem:[%s379 + $0xb8] sm:$0xf]
        %v487 = vld [vmem:[%s379 + $0xbc] sm:$0xf]
        %v488 = vld [vmem:[%s379 + $0xc0] sm:$0xf]
        %v489 = vld [vmem:[%s379 + $0xc4] sm:$0xf]
        %v490 = vld [vmem:[%s379 + $0xc8] sm:$0xf]
        %v491 = vld [vmem:[%s379 + $0xcc] sm:$0xf]
        %v492 = vld [vmem:[%s379 + $0xd0] sm:$0xf]
        %v493 = vld [vmem:[%s379 + $0xd4] sm:$0xf]
        %v494 = vld [vmem:[%s379 + $0xd8] sm:$0xf]
        %v495 = vld [vmem:[%s379 + $0xdc] sm:$0xf]
        %v496 = vld [vmem:[%s379 + $0xe0] sm:$0xf]
        %v497 = vld [vmem:[%s379 + $0xe4] sm:$0xf]
        %v498 = vld [vmem:[%s379 + $0xe8] sm:$0xf]
        %v499 = vld [vmem:[%s379 + $0xec] sm:$0xf]
        %v500 = vld [vmem:[%s379 + $0xf0] sm:$0xf]
        %v501 = vld [vmem:[%s379 + $0xf4] sm:$0xf]
        %v502 = vld [vmem:[%s379 + $0xf8] sm:$0xf]
        %v503 = vld [vmem:[%s379 + $0xfc] sm:$0xf]
        %v506 = vunpack.c.l.b16 %v438
        %v507 = vunpack.c.h.b16 %v438
        %v508 = vunpack.c.l.b16 %v439
        %v509 = vunpack.c.h.b16 %v439
        %v510 = vpack.c.b16 %v506, %v506
        %v511 = vpack.c.b16 %v507, %v507
        %v512 = vpack.c.b16 %v508, %v508
        %v513 = vpack.c.b16 %v509, %v509
        %v582 = vunpack.c.l.b16 %v440
        %v583 = vunpack.c.l.b16 %v441
        %v584 = vunpack.c.l.b16 %v442
        %v585 = vunpack.c.l.b16 %v443
        %v586 = vunpack.c.l.b16 %v444
        %v587 = vunpack.c.l.b16 %v445
        %v588 = vunpack.c.l.b16 %v446
        %v589 = vunpack.c.l.b16 %v447
        %v590 = vunpack.c.l.b16 %v448
        %v591 = vunpack.c.l.b16 %v449
        %v592 = vunpack.c.l.b16 %v450
        %v593 = vunpack.c.l.b16 %v451
        %v594 = vunpack.c.l.b16 %v452
        %v595 = vunpack.c.l.b16 %v453
        %v596 = vunpack.c.l.b16 %v454
        %v597 = vunpack.c.l.b16 %v455
        %v598 = vunpack.c.l.b16 %v456
        %v599 = vunpack.c.l.b16 %v457
        %v600 = vunpack.c.l.b16 %v458
        %v601 = vunpack.c.l.b16 %v459
        %v602 = vunpack.c.l.b16 %v460
        %v603 = vunpack.c.l.b16 %v461
        %v604 = vunpack.c.l.b16 %v462
        %v605 = vunpack.c.l.b16 %v463
        %v606 = vunpack.c.l.b16 %v464
        %v607 = vunpack.c.l.b16 %v465
        %v608 = vunpack.c.l.b16 %v466
        %v609 = vunpack.c.l.b16 %v467
        %v610 = vunpack.c.l.b16 %v468
        %v611 = vunpack.c.l.b16 %v469
        %v612 = vunpack.c.l.b16 %v470
        %v613 = vunpack.c.l.b16 %v471
        %v614 = vunpack.c.l.b16 %v472
        %v615 = vunpack.c.l.b16 %v473
        %v616 = vunpack.c.l.b16 %v474
        %v617 = vunpack.c.l.b16 %v475
        %v618 = vunpack.c.l.b16 %v476
        %v619 = vunpack.c.l.b16 %v477
        %v620 = vunpack.c.l.b16 %v478
        %v621 = vunpack.c.l.b16 %v479
        %v622 = vunpack.c.l.b16 %v480
        %v623 = vunpack.c.l.b16 %v481
        %v624 = vunpack.c.l.b16 %v482
        %v625 = vunpack.c.l.b16 %v483
        %v626 = vunpack.c.l.b16 %v484
        %v627 = vunpack.c.l.b16 %v485
        %v628 = vunpack.c.l.b16 %v486
        %v629 = vunpack.c.l.b16 %v487
        %v630 = vunpack.c.l.b16 %v488
        %v631 = vunpack.c.l.b16 %v489
        %v632 = vunpack.c.l.b16 %v490
        %v633 = vunpack.c.l.b16 %v491
        %v634 = vunpack.c.l.b16 %v492
        %v635 = vunpack.c.l.b16 %v493
        %v636 = vunpack.c.l.b16 %v494
        %v637 = vunpack.c.l.b16 %v495
        %v638 = vunpack.c.l.b16 %v496
        %v639 = vunpack.c.l.b16 %v497
        %v640 = vunpack.c.l.b16 %v498
        %v641 = vunpack.c.l.b16 %v499
        %v642 = vunpack.c.l.b16 %v500
        %v643 = vunpack.c.l.b16 %v501
        %v644 = vunpack.c.l.b16 %v502
        %v645 = vunpack.c.l.b16 %v503
        %v646 = vpack.c.b16 %v583, %v582
        %v647 = vpack.c.b16 %v585, %v584
        %v648 = vpack.c.b16 %v587, %v586
        %v649 = vpack.c.b16 %v589, %v588
        %v650 = vpack.c.b16 %v591, %v590
        %v651 = vpack.c.b16 %v593, %v592
        %v652 = vpack.c.b16 %v595, %v594
        %v653 = vpack.c.b16 %v597, %v596
        %v654 = vpack.c.b16 %v599, %v598
        %v655 = vpack.c.b16 %v601, %v600
        %v656 = vpack.c.b16 %v603, %v602
        %v657 = vpack.c.b16 %v605, %v604
        %v658 = vpack.c.b16 %v607, %v606
        %v659 = vpack.c.b16 %v609, %v608
        %v660 = vpack.c.b16 %v611, %v610
        %v661 = vpack.c.b16 %v613, %v612
        %v662 = vpack.c.b16 %v615, %v614
        %v663 = vpack.c.b16 %v617, %v616
        %v664 = vpack.c.b16 %v619, %v618
        %v665 = vpack.c.b16 %v621, %v620
        %v666 = vpack.c.b16 %v623, %v622
        %v667 = vpack.c.b16 %v625, %v624
        %v668 = vpack.c.b16 %v627, %v626
        %v669 = vpack.c.b16 %v629, %v628
        %v670 = vpack.c.b16 %v631, %v630
        %v671 = vpack.c.b16 %v633, %v632
        %v672 = vpack.c.b16 %v635, %v634
        %v673 = vpack.c.b16 %v637, %v636
        %v674 = vpack.c.b16 %v639, %v638
        %v675 = vpack.c.b16 %v641, %v640
        %v676 = vpack.c.b16 %v643, %v642
        %v677 = vpack.c.b16 %v645, %v644
        %710 = vmatpush.bf16.msra.mxu0 %v653
        %711 = vmatpush.bf16.msra.mxu0 %v652
        %712 = vmatpush.bf16.msra.mxu0 %v651
        %713 = vmatpush.bf16.msra.mxu0 %v650
        %714 = vmatpush.bf16.msra.mxu0 %v649
        %715 = vmatpush.bf16.msra.mxu0 %v648
        %716 = vmatpush.bf16.msra.mxu0 %v647
        %717 = vmatpush.bf16.msra.mxu0 %v646
        %718 = vmatmul.bf16.gmra.mxu0 %v510
        %v719 = vpop.f32.mrf.mxu0
        %v720 = vadd.f32 0.0, %v719
        %v721 = vpop.f32.mrf.mxu0
        %722 = vdwg.mxu0
        %723 = vmatpush.bf16.msra.mxu0 %v661
        %724 = vmatpush.bf16.msra.mxu0 %v660
        %725 = vmatpush.bf16.msra.mxu0 %v659
        %726 = vmatpush.bf16.msra.mxu0 %v658
        %727 = vmatpush.bf16.msra.mxu0 %v657
        %728 = vmatpush.bf16.msra.mxu0 %v656
        %729 = vmatpush.bf16.msra.mxu0 %v655
        %730 = vmatpush.bf16.msra.mxu0 %v654
        %731 = vmatmul.bf16.gmra.mxu0 %v511
        %v732 = vpop.f32.mrf.mxu0
        %v733 = vadd.f32 %v720, %v732
        %v734 = vpop.f32.mrf.mxu0
        %735 = vdwg.mxu0
        %736 = vmatpush.bf16.msra.mxu0 %v669
        %737 = vmatpush.bf16.msra.mxu0 %v668
        %738 = vmatpush.bf16.msra.mxu0 %v667
        %739 = vmatpush.bf16.msra.mxu0 %v666
        %740 = vmatpush.bf16.msra.mxu0 %v665
        %741 = vmatpush.bf16.msra.mxu0 %v664
        %742 = vmatpush.bf16.msra.mxu0 %v663
        %743 = vmatpush.bf16.msra.mxu0 %v662
        %744 = vmatmul.bf16.gmra.mxu0 %v512
        %v745 = vpop.f32.mrf.mxu0
        %v746 = vadd.f32 %v733, %v745
        %v747 = vpop.f32.mrf.mxu0
        %748 = vdwg.mxu0
        %749 = vmatpush.bf16.msra.mxu0 %v677
        %750 = vmatpush.bf16.msra.mxu0 %v676
        %751 = vmatpush.bf16.msra.mxu0 %v675
        %752 = vmatpush.bf16.msra.mxu0 %v674
        %753 = vmatpush.bf16.msra.mxu0 %v673
        %754 = vmatpush.bf16.msra.mxu0 %v672
        %755 = vmatpush.bf16.msra.mxu0 %v671
        %756 = vmatpush.bf16.msra.mxu0 %v670
        %757 = vmatmul.bf16.gmra.mxu0 %v513
        %v758 = vpop.f32.mrf.mxu0
        %v759 = vadd.f32 %v746, %v758
        %v760 = vpop.f32.mrf.mxu0
        %761 = vdwg.mxu0
        %v762 = vadd.f32 %v437, %v759
        %763 = vst [vmem:[#allocation2] sm:$0xff] %v762
        %p764 = scmp.eq.s32.totalorder %s28, 1
        // Predicated region
        $region81: #{tpu_custom_call.1} parent=55 // pred_check
          %p765 = pneg %p764
        $region82: #{tpu_custom_call.1} parent=55 // pred_check_branch
          %767 = sbr.rel (%p765) target = $region84
        $region83: #{tpu_custom_call.1} parent=55 // pred_region
          %v768 = vld [vmem:[#allocation2] sm:$0xff]
          %v769 = vpack.c.bf16 %v768, %v768
          %v770 = vld [vmem:[#allocation8] sm:$0xf]
          %v771 = vld [vmem:[#allocation8 + $0x4] sm:$0xf]
          %v772 = vld [vmem:[#allocation8 + $0x8] sm:$0xf]
          %v773 = vld [vmem:[#allocation8 + $0xc] sm:$0xf]
          %v774 = vld [vmem:[#allocation8 + $0x10] sm:$0xf]
          %v775 = vld [vmem:[#allocation8 + $0x14] sm:$0xf]
          %v776 = vld [vmem:[#allocation8 + $0x18] sm:$0xf]
          %v777 = vld [vmem:[#allocation8 + $0x1c] sm:$0xf]
          %v778 = vld [vmem:[#allocation8 + $0x20] sm:$0xf]
          %v779 = vld [vmem:[#allocation8 + $0x24] sm:$0xf]
          %v780 = vld [vmem:[#allocation8 + $0x28] sm:$0xf]
          %v781 = vld [vmem:[#allocation8 + $0x2c] sm:$0xf]
          %v782 = vld [vmem:[#allocation8 + $0x30] sm:$0xf]
          %v783 = vld [vmem:[#allocation8 + $0x34] sm:$0xf]
          %v784 = vld [vmem:[#allocation8 + $0x38] sm:$0xf]
          %v785 = vld [vmem:[#allocation8 + $0x3c] sm:$0xf]
          %v802 = vunpack.c.l.b16 %v770
          %v803 = vunpack.c.l.b16 %v771
          %v804 = vunpack.c.l.b16 %v772
          %v805 = vunpack.c.l.b16 %v773
          %v806 = vunpack.c.l.b16 %v774
          %v807 = vunpack.c.l.b16 %v775
          %v808 = vunpack.c.l.b16 %v776
          %v809 = vunpack.c.l.b16 %v777
          %v810 = vunpack.c.l.b16 %v778
          %v811 = vunpack.c.l.b16 %v779
          %v812 = vunpack.c.l.b16 %v780
          %v813 = vunpack.c.l.b16 %v781
          %v814 = vunpack.c.l.b16 %v782
          %v815 = vunpack.c.l.b16 %v783
          %v816 = vunpack.c.l.b16 %v784
          %v817 = vunpack.c.l.b16 %v785
          %v818 = vpack.c.b16 %v803, %v802
          %v819 = vpack.c.b16 %v805, %v804
          %v820 = vpack.c.b16 %v807, %v806
          %v821 = vpack.c.b16 %v809, %v808
          %v822 = vpack.c.b16 %v811, %v810
          %v823 = vpack.c.b16 %v813, %v812
          %v824 = vpack.c.b16 %v815, %v814
          %v825 = vpack.c.b16 %v817, %v816
          %834 = vmatpush.bf16.msra.mxu0 %v825
          %835 = vmatpush.bf16.msra.mxu0 %v824
          %836 = vmatpush.bf16.msra.mxu0 %v823
          %837 = vmatpush.bf16.msra.mxu0 %v822
          %838 = vmatpush.bf16.msra.mxu0 %v821
          %839 = vmatpush.bf16.msra.mxu0 %v820
          %840 = vmatpush.bf16.msra.mxu0 %v819
          %841 = vmatpush.bf16.msra.mxu0 %v818
          %842 = vmatmul.bf16.gmra.mxu0 %v769
          %v843 = vpop.f32.mrf.mxu0
          %v844 = vadd.f32 0.0, %v843
          %v845 = vpop.f32.mrf.mxu0
          %846 = vdwg.mxu0
          %v847 = vld [vmem:[%s3] sm:$0x1]
          %v848 = vld [vmem:[%s4] sm:$0x1]
          %v849 = vrot.slane %v844, 4
          %v850 = vadd.f32 %v844, %v849
          %v851 = vrot.slane %v850, 2
          %v852 = vadd.f32 %v850, %v851
          %v853 = vrot.slane %v852, 1
          %v854 = vadd.f32 %v852, %v853
          %v855 = vrcp.pop 8.0
          %v856 = vmul.f32 8.0, %v855
          %v857 = vsub.f32 1.0, %v856
          %v858 = vmul.f32 %v855, %v857
          %v859 = vadd.f32 %v855, %v858
          %vm860 = vweird.f32 %v855
          %v861 = vsel %vm860, %v855, %v859
          %v862 = vmul.f32 %v854, %v861
          %v863 = vsub.f32 %v844, %v862
          %v864 = vmul.f32 %v863, %v863
          %v865 = vrot.slane %v864, 4
          %v866 = vadd.f32 %v864, %v865
          %v867 = vrot.slane %v866, 2
          %v868 = vadd.f32 %v866, %v867
          %v869 = vrot.slane %v868, 1
          %v870 = vadd.f32 %v868, %v869
          %v871 = vmul.f32 %v870, %v861
          %v872 = vadd.f32 %v871, 1e-05
          %v873 = vrsqrt.pop %v872
          %v874 = vmul.f32 %v873, %v872
          %v875 = vmul.f32 %v874, %v873
          %v876 = vmul.f32 0.5, %v875
          %v877 = vsub.f32 1.5, %v876
          %v878 = vmul.f32 %v873, %v877
          %vm879 = vweird.f32 %v872
          %vm880 = vweird.f32 %v873
          %vm881 = vmor %vm879, %vm880
          %v882 = vsel %vm881, %v873, %v878
          %v883 = vmul.f32 %v882, %v847
          %v884 = vperm.slane %v883, 0
          %v885 = vmul.f32 %v863, %v884
          %v887 = vperm.slane %v848, 0
          %v889 = vadd.f32 %v885, %v887
          %v890 = vmax.f32 %v889, 0.0
          %v891 = vpack.c.bf16 %v890, %v890
          %v892 = vld [vmem:[#allocation9] sm:$0xf]
          %v893 = vld [vmem:[#allocation9 + $0x4] sm:$0xf]
          %v894 = vld [vmem:[#allocation9 + $0x8] sm:$0xf]
          %v895 = vld [vmem:[#allocation9 + $0xc] sm:$0xf]
          %v896 = vld [vmem:[#allocation9 + $0x10] sm:$0xf]
          %v897 = vld [vmem:[#allocation9 + $0x14] sm:$0xf]
          %v898 = vld [vmem:[#allocation9 + $0x18] sm:$0xf]
          %v899 = vld [vmem:[#allocation9 + $0x1c] sm:$0xf]
          %v900 = vld [vmem:[#allocation9 + $0x20] sm:$0xf]
          %v901 = vld [vmem:[#allocation9 + $0x24] sm:$0xf]
          %v902 = vld [vmem:[#allocation9 + $0x28] sm:$0xf]
          %v903 = vld [vmem:[#allocation9 + $0x2c] sm:$0xf]
          %v904 = vld [vmem:[#allocation9 + $0x30] sm:$0xf]
          %v905 = vld [vmem:[#allocation9 + $0x34] sm:$0xf]
          %v906 = vld [vmem:[#allocation9 + $0x38] sm:$0xf]
          %v907 = vld [vmem:[#allocation9 + $0x3c] sm:$0xf]
          %v924 = vunpack.c.l.b16 %v892
          %v925 = vunpack.c.l.b16 %v893
          %v926 = vunpack.c.l.b16 %v894
          %v927 = vunpack.c.l.b16 %v895
          %v928 = vunpack.c.l.b16 %v896
          %v929 = vunpack.c.l.b16 %v897
          %v930 = vunpack.c.l.b16 %v898
          %v931 = vunpack.c.l.b16 %v899
          %v932 = vunpack.c.l.b16 %v900
          %v933 = vunpack.c.l.b16 %v901
          %v934 = vunpack.c.l.b16 %v902
          %v935 = vunpack.c.l.b16 %v903
          %v936 = vunpack.c.l.b16 %v904
          %v937 = vunpack.c.l.b16 %v905
          %v938 = vunpack.c.l.b16 %v906
          %v939 = vunpack.c.l.b16 %v907
          %v940 = vpack.c.b16 %v925, %v924
          %v941 = vpack.c.b16 %v927, %v926
          %v942 = vpack.c.b16 %v929, %v928
          %v943 = vpack.c.b16 %v931, %v930
          %v944 = vpack.c.b16 %v933, %v932
          %v945 = vpack.c.b16 %v935, %v934
          %v946 = vpack.c.b16 %v937, %v936
          %v947 = vpack.c.b16 %v939, %v938
          %956 = vmatpush.bf16.msra.mxu0 %v947
          %957 = vmatpush.bf16.msra.mxu0 %v946
          %958 = vmatpush.bf16.msra.mxu0 %v945
          %959 = vmatpush.bf16.msra.mxu0 %v944
          %960 = vmatpush.bf16.msra.mxu0 %v943
          %961 = vmatpush.bf16.msra.mxu0 %v942
          %962 = vmatpush.bf16.msra.mxu0 %v941
          %963 = vmatpush.bf16.msra.mxu0 %v940
          %964 = vmatmul.bf16.gmra.mxu0 %v891
          %v965 = vpop.f32.mrf.mxu0
          %v966 = vadd.f32 0.0, %v965
          %v967 = vpop.f32.mrf.mxu0
          %968 = vdwg.mxu0
          %v969 = vld [vmem:[%s6] sm:$0x1]
          %v970 = vld [vmem:[%s7] sm:$0x1]
          %v971 = vrot.slane %v966, 4
          %v972 = vadd.f32 %v966, %v971
          %v973 = vrot.slane %v972, 2
          %v974 = vadd.f32 %v972, %v973
          %v975 = vrot.slane %v974, 1
          %v976 = vadd.f32 %v974, %v975
          %v977 = vmul.f32 %v976, %v861
          %v978 = vsub.f32 %v966, %v977
          %v979 = vmul.f32 %v978, %v978
          %v980 = vrot.slane %v979, 4
          %v981 = vadd.f32 %v979, %v980
          %v982 = vrot.slane %v981, 2
          %v983 = vadd.f32 %v981, %v982
          %v984 = vrot.slane %v983, 1
          %v985 = vadd.f32 %v983, %v984
          %v986 = vmul.f32 %v985, %v861
          %v987 = vadd.f32 %v986, 1e-05
          %v988 = vrsqrt.pop %v987
          %v989 = vmul.f32 %v988, %v987
          %v990 = vmul.f32 %v989, %v988
          %v991 = vmul.f32 0.5, %v990
          %v992 = vsub.f32 1.5, %v991
          %v993 = vmul.f32 %v988, %v992
          %vm994 = vweird.f32 %v987
          %vm995 = vweird.f32 %v988
          %vm996 = vmor %vm994, %vm995
          %v997 = vsel %vm996, %v988, %v993
          %v998 = vmul.f32 %v997, %v969
          %v999 = vperm.slane %v998, 0
          %v1000 = vmul.f32 %v978, %v999
          %v1002 = vperm.slane %v970, 0
          %v1004 = vadd.f32 %v1000, %v1002
          %v1005 = vmax.f32 %v1004, 0.0
          %v1006 = vpack.c.bf16 %v1005, %v1005
          %v1007 = vld [vmem:[#allocation11] sm:$0xf]
          %v1008 = vld [vmem:[#allocation11 + $0x4] sm:$0xf]
          %v1009 = vld [vmem:[#allocation11 + $0x8] sm:$0xf]
          %v1010 = vld [vmem:[#allocation11 + $0xc] sm:$0xf]
          %v1011 = vld [vmem:[#allocation11 + $0x10] sm:$0xf]
          %v1012 = vld [vmem:[#allocation11 + $0x14] sm:$0xf]
          %v1013 = vld [vmem:[#allocation11 + $0x18] sm:$0xf]
          %v1014 = vld [vmem:[#allocation11 + $0x1c] sm:$0xf]
          %v1015 = vld [vmem:[#allocation11 + $0x20] sm:$0xf]
          %v1016 = vld [vmem:[#allocation11 + $0x24] sm:$0xf]
          %v1017 = vld [vmem:[#allocation11 + $0x28] sm:$0xf]
          %v1018 = vld [vmem:[#allocation11 + $0x2c] sm:$0xf]
          %v1019 = vld [vmem:[#allocation11 + $0x30] sm:$0xf]
          %v1020 = vld [vmem:[#allocation11 + $0x34] sm:$0xf]
          %v1021 = vld [vmem:[#allocation11 + $0x38] sm:$0xf]
          %v1022 = vld [vmem:[#allocation11 + $0x3c] sm:$0xf]
          %v1039 = vunpack.c.l.b16 %v1007
          %v1040 = vunpack.c.l.b16 %v1008
          %v1041 = vunpack.c.l.b16 %v1009
          %v1042 = vunpack.c.l.b16 %v1010
          %v1043 = vunpack.c.l.b16 %v1011
          %v1044 = vunpack.c.l.b16 %v1012
          %v1045 = vunpack.c.l.b16 %v1013
          %v1046 = vunpack.c.l.b16 %v1014
          %v1047 = vunpack.c.l.b16 %v1015
          %v1048 = vunpack.c.l.b16 %v1016
          %v1049 = vunpack.c.l.b16 %v1017
          %v1050 = vunpack.c.l.b16 %v1018
          %v1051 = vunpack.c.l.b16 %v1019
          %v1052 = vunpack.c.l.b16 %v1020
          %v1053 = vunpack.c.l.b16 %v1021
          %v1054 = vunpack.c.l.b16 %v1022
          %v1055 = vpack.c.b16 %v1040, %v1039
          %v1056 = vpack.c.b16 %v1042, %v1041
          %v1057 = vpack.c.b16 %v1044, %v1043
          %v1058 = vpack.c.b16 %v1046, %v1045
          %v1059 = vpack.c.b16 %v1048, %v1047
          %v1060 = vpack.c.b16 %v1050, %v1049
          %v1061 = vpack.c.b16 %v1052, %v1051
          %v1062 = vpack.c.b16 %v1054, %v1053
          %1071 = vmatpush.bf16.msra.mxu0 %v1062
          %1072 = vmatpush.bf16.msra.mxu0 %v1061
          %1073 = vmatpush.bf16.msra.mxu0 %v1060
          %1074 = vmatpush.bf16.msra.mxu0 %v1059
          %1075 = vmatpush.bf16.msra.mxu0 %v1058
          %1076 = vmatpush.bf16.msra.mxu0 %v1057
          %1077 = vmatpush.bf16.msra.mxu0 %v1056
          %1078 = vmatpush.bf16.msra.mxu0 %v1055
          %1079 = vmatmul.bf16.gmra.mxu0 %v1006
          %v1080 = vpop.f32.mrf.mxu0
          %v1081 = vadd.f32 0.0, %v1080
          %v1082 = vpop.f32.mrf.mxu0
          %1083 = vdwg.mxu0
          %v1084 = vrot.slane %v1081, 4
          %v1085 = vadd.f32 %v1081, %v1084
          %v1086 = vrot.slane %v1085, 2
          %v1087 = vadd.f32 %v1085, %v1086
          %v1088 = vrot.slane %v1087, 1
          %v1089 = vadd.f32 %v1087, %v1088
          %v1090 = vmul.f32 %v1089, %v861
          %v1091 = vsub.f32 %v1081, %v1090
          %v1092 = vmul.f32 %v1091, %v1091
          %v1093 = vrot.slane %v1092, 4
          %v1094 = vadd.f32 %v1092, %v1093
          %v1095 = vrot.slane %v1094, 2
          %v1096 = vadd.f32 %v1094, %v1095
          %v1097 = vrot.slane %v1096, 1
          %v1098 = vadd.f32 %v1096, %v1097
          %v1099 = vmul.f32 %v1098, %v861
          %v1100 = vadd.f32 %v1099, 1e-05
          %v1101 = vrsqrt.pop %v1100
          %v1102 = vmul.f32 %v1101, %v1100
          %v1103 = vmul.f32 %v1102, %v1101
          %v1104 = vmul.f32 0.5, %v1103
          %v1105 = vsub.f32 1.5, %v1104
          %v1106 = vmul.f32 %v1101, %v1105
          %vm1107 = vweird.f32 %v1100
          %vm1108 = vweird.f32 %v1101
          %vm1109 = vmor %vm1107, %vm1108
          %v1110 = vsel %vm1109, %v1101, %v1106
          %v1111 = vmul.f32 %v1091, %v1110
          %1112 = vst [vmem:[#allocation12] sm:$0xff] %v1111
        $region84: #{tpu_custom_call.1} parent=55 // pred_fallthru
          _
        // Predicated region
        $region85: #{tpu_custom_call.1} parent=55 // pred_check
          %p1113 = pneg %p240
        $region86: #{tpu_custom_call.1} parent=55 // pred_check_branch
          %1115 = sbr.rel (%p1113) target = $region88
        $region87: #{tpu_custom_call.1} parent=55 // pred_region
          %1117 = vsyncadd [#allocation5], 0
          %s1119 = sshll.u32 [#allocation12], 4
          %s1120 = int_to_ptr.vmem [resolvable:$true] %s1119
          %s1121 = sshll.u32 %s9, 4
          %s1122 = int_to_ptr.hbm [resolvable:$true] %s1121
          %1124 = dma.vmem_to_hbm [thread:$0]  %s1120, 128, %s1122, [#allocation5]
        $region88: #{tpu_custom_call.1} parent=55 // pred_fallthru
          _
        // Predicated region
        $region89: #{tpu_custom_call.1} parent=55 // pred_check
          %p1125 = pneg %p240
        $region90: #{tpu_custom_call.1} parent=55 // pred_check_branch
          %1127 = sbr.rel (%p1125) target = $region92
        $region91: #{tpu_custom_call.1} parent=55 // pred_region
          %1129 = dma.done [#allocation5], 128
        $region92: #{tpu_custom_call.1} parent=55 // pred_fallthru
          _
      $region56: #{tpu_custom_call.1} parent=5 // pred_fallthru
        _
      %p1130 = scmp.le.s32.totalorder 2, %s23
      // Predicated region
      $region93: #{tpu_custom_call.1} parent=5 // pred_check
        %p1131 = pneg %p1130
      $region94: #{tpu_custom_call.1} parent=5 // pred_check_branch
        %1133 = sbr.rel (%p1131) target = $region96
      $region95: #{tpu_custom_call.1} parent=5 // pred_region
        %s1134 = ssub.s32 %s23, 2
      $region96: #{tpu_custom_call.1} parent=5 // pred_fallthru
        _
    $region6: #{tpu_custom_call.1} parent=1 // loop_footer
      %s27 = sadd.s32 1, %s23
    $region7: #{tpu_custom_call.1} parent=1 // loop_footer_branch
      %22 = sbr.rel target = $region3
    $region8: #{tpu_custom_call.1} parent=1 // loop_exit
      _
    %1135 = vsyncpa [#allocation4], 1
    %s1136 = scalar_lea.sflag [#allocation4], 1
    %1137 = vsyncpa %s1136, 1
    %1138 = vsyncpa [#allocation7], 1
    %s1139 = scalar_lea.sflag [#allocation7], 1
    %1140 = vsyncpa %s1139, 1
    %1141 = vsyncpa [#allocation10], 1
    %1142 = vsyncpa [#allocation5], 1
    %s1143 = scalar_lea.sflag [#allocation5], 1
    %1144 = vsyncpa %s1143, 1

</llo_original>
